<compile_context>
chip_gen: v5e
topology: v5e:2x2
jax: 0.10.0
libtpu: 0.0.40
codegen_flags: <defaults>
</compile_context>

<pallas_src>
import functools

import jax
import jax.numpy as jnp
from jax.experimental import pallas as pl
from jax.experimental.pallas import tpu as pltpu

LATENT_DIM = 4


def _vae_forward_kernel(d_dim, l_dim, h_dim,
                        x_ref, eps_ref,
                        w1_ref, w2_ref,            # encoder
                        wd1_ref, wd2_ref,          # decoder hidden layers
                        w3p_ref, whp_ref,          # packed final layer + fused head
                        biases_ref,                # all biases, packed (8, width)
                        out_ref):                  # [recon | mu | log_var] (bf16)
    cdt = x_ref.dtype          # matmul operand dtype (bf16)
    f32 = jnp.float32
    slab_dim = d_dim + 2 * l_dim

    x = x_ref[...]

    # Hoist all biases once (JAX does not CSE broadcast_in_dim).
    biases = biases_ref[...]
    b1 = biases[0:1, :h_dim]
    b2 = biases[1:2, :h_dim]
    bd1 = biases[2:3, :h_dim]
    bd2 = biases[3:4, :h_dim]
    bslab = biases[4:5, :slab_dim]     # [bd3 | bmu | bvar]

    # encoder: Linear -> ReLU -> Linear -> ReLU (f32 accumulate, bf16 feed)
    h = jnp.dot(x, w1_ref[...], preferred_element_type=f32) + b1
    h = jnp.maximum(h, 0.0).astype(cdt)
    h = jnp.dot(h, w2_ref[...], preferred_element_type=f32) + b2
    h = jnp.maximum(h, 0.0).astype(cdt)

    # Fused latent head: headb = h @ [0 | Wmu | Wvar] + [bd3 | bmu | bvar].
    # Lanes [0, D) hold bd3 (the final-layer bias); lanes [D, D+2L) hold
    # mu | log_var.  Reused both for reparameterization and the output slab.
    headb = jnp.dot(h, whp_ref[...], preferred_element_type=f32) + bslab
    mu = headb[:, d_dim:d_dim + l_dim]
    log_var = headb[:, d_dim + l_dim:slab_dim]

    # reparameterize: z = mu + eps * exp(0.5 * log_var)   (eps stays f32)
    std = jnp.exp(0.5 * log_var)
    z = (mu + eps_ref[...] * std).astype(cdt)

    # decoder: Linear -> ReLU -> Linear -> ReLU
    d = jnp.dot(z, wd1_ref[...], preferred_element_type=f32) + bd1
    d = jnp.maximum(d, 0.0).astype(cdt)
    d = jnp.dot(d, wd2_ref[...], preferred_element_type=f32) + bd2
    d = jnp.maximum(d, 0.0).astype(cdt)

    # final Linear fused with output packing (single lane-dense bf16 store):
    #   slab = d @ [Wd3 | 0] + headb   ==  [recon | mu | log_var]
    slab = jnp.dot(d, w3p_ref[...], preferred_element_type=f32) + headb
    out_ref[...] = slab.astype(out_ref.dtype)


def _linear_params(key, in_dim, out_dim):
    """Deterministic PyTorch-style Linear init: U(-1/sqrt(in), 1/sqrt(in))."""
    kw, kb = jax.random.split(key)
    bound = 1.0 / jnp.sqrt(jnp.float32(in_dim))
    # Pre-transposed weight (in, out) and bias as (1, out) for broadcasting.
    w_t = jax.random.uniform(kw, (in_dim, out_dim), jnp.float32, -bound, bound)
    b = jax.random.uniform(kb, (1, out_dim), jnp.float32, -bound, bound)
    return w_t, b


def init_financial_vae_params(key, input_dim, hidden_dim=8, latent_dim=LATENT_DIM):
    keys = jax.random.split(key, 7)
    return {
        "enc1": _linear_params(keys[0], input_dim, hidden_dim),
        "enc2": _linear_params(keys[1], hidden_dim, hidden_dim),
        "fc_mu": _linear_params(keys[2], hidden_dim, latent_dim),
        "fc_var": _linear_params(keys[3], hidden_dim, latent_dim),
        "dec1": _linear_params(keys[4], latent_dim, hidden_dim),
        "dec2": _linear_params(keys[5], hidden_dim, hidden_dim),
        "dec3": _linear_params(keys[6], hidden_dim, input_dim),
    }


def _cdiv(a, b):
    return -(-a // b)


def _round_up(n, m):
    return _cdiv(n, m) * m


def _choose_tiling(batch, tile_batch, max_tile=4096):
    """Pick (tile_rows, padded_batch, grid_len).

    * >=16-row alignment (bf16 sublane packing), 128/256-row alignment for
      larger tiles.
    * Capped at max_tile rows (lane-padding-aware VMEM bound, see module note).
    * >=2 grid steps whenever the batch allows, so v7x's 2 TensorCores both
      get work under dimension_semantics=("parallel",).
    """
    pb16 = _round_up(max(batch, 1), 16)
    cap = max(16, min(tile_batch, max_tile))
    n_tiles = _cdiv(pb16, cap)
    if pb16 >= 512 and n_tiles < 2:
        n_tiles = 2
    tb = _cdiv(pb16, n_tiles)
    if tb >= 1024:
        tb = _round_up(tb, 256)
    elif tb >= 256:
        tb = _round_up(tb, 128)
    else:
        tb = _round_up(tb, 16)
    padded_batch = _round_up(batch, tb)
    return tb, padded_batch, padded_batch // tb


def financial_vae_forward(params, x, eps, *, tile_batch=4096,
                          compute_dtype=jnp.bfloat16):
    """Full VAE forward in one batch-tiled Pallas kernel.

    Returns (reconstruction, mu, log_var), matching FinancialVAE.forward.
    """
    batch, input_dim = x.shape
    hidden_dim = params["enc1"][0].shape[1]
    latent_dim = params["fc_mu"][0].shape[1]
    D, L, H = input_dim, latent_dim, hidden_dim
    slab_dim = D + 2 * L

    # --- batch tiling / padding -------------------------------------------
    tb, padded_batch, grid_len = _choose_tiling(batch, tile_batch)
    if padded_batch != batch:
        pad = padded_batch - batch
        x = jnp.pad(x, ((0, pad), (0, 0)))
        eps = jnp.pad(eps, ((0, pad), (0, 0)))
    grid = (grid_len,)

    # --- pack / cast parameters (layout plumbing stays in the JAX wrapper) --
    cdt = compute_dtype
    (w1, b1), (w2, b2) = params["enc1"], params["enc2"]
    (wmu, bmu), (wvar, bvar) = params["fc_mu"], params["fc_var"]
    (wd1, bd1), (wd2, bd2), (wd3, bd3) = (
        params["dec1"], params["dec2"], params["dec3"])

    # Packed final layer: [Wd3 | 0]  and fused head: [0 | Wmu | Wvar].
    w3p = jnp.concatenate([wd3, jnp.zeros((H, 2 * L), wd3.dtype)], axis=1)    # (H, D+2L)
    whp = jnp.concatenate([jnp.zeros((H, D), wmu.dtype), wmu, wvar], axis=1)  # (H, D+2L)
    bslab = jnp.concatenate([bd3, bmu, bvar], axis=1)                         # (1, D+2L)

    # All bias rows packed into one resident f32 array (8, pack_width):
    # rows 0..3 = b1, b2, bd1, bd2 (zero-padded), row 4 = bslab.
    pack_width = max(H, slab_dim)

    def _pad_row(b):
        return jnp.pad(b, ((0, 0), (0, pack_width - b.shape[1])))

    biases = jnp.concatenate(
        [_pad_row(b1), _pad_row(b2), _pad_row(bd1), _pad_row(bd2),
         _pad_row(bslab), jnp.zeros((3, pack_width), jnp.float32)], axis=0)

    flat_args = [
        x.astype(cdt),                 # (padded_batch, D)  bf16, batch-tiled
        eps.astype(jnp.float32),       # (padded_batch, L)  f32,  batch-tiled
        w1.astype(cdt), w2.astype(cdt),
        wd1.astype(cdt), wd2.astype(cdt),
        w3p.astype(cdt), whp.astype(cdt),
        biases,
    ]

    def batch_spec(width):
        return pl.BlockSpec((tb, width), lambda i: (i, 0))

    def resident_spec(a):
        # Full-array block, constant index -> DMA'd once, resident across grid.
        return pl.BlockSpec(a.shape, lambda i: (0, 0))

    in_specs = ([batch_spec(D), batch_spec(L)]
                + [resident_spec(a) for a in flat_args[2:]])

    kernel = functools.partial(_vae_forward_kernel, D, L, H)

    out = pl.pallas_call(
        kernel,
        out_shape=jax.ShapeDtypeStruct((padded_batch, slab_dim), jnp.bfloat16),
        grid=grid,
        in_specs=in_specs,
        out_specs=batch_spec(slab_dim),
        compiler_params=pltpu.CompilerParams(
            dimension_semantics=("parallel",),
            vmem_limit_bytes=48 * 1024 * 1024),
    )(*flat_args)

    # Slice the slab; hand the caller f32 (matching the PyTorch module's dtype).
    recon = out[:batch, :D].astype(jnp.float32)
    mu = out[:batch, D:D + L].astype(jnp.float32)
    log_var = out[:batch, D + L:].astype(jnp.float32)
    return recon, mu, log_var


def _reference_forward(params, x, eps, compute_dtype=jnp.bfloat16):
    """Pure-JAX reference with the same bf16/f32 mixed-precision scheme."""
    cdt = compute_dtype
    f32 = jnp.float32

    def lin(p, v):
        return jnp.dot(v.astype(cdt), p[0].astype(cdt),
                       preferred_element_type=f32) + p[1]

    h = jax.nn.relu(lin(params["enc1"], x))
    h = jax.nn.relu(lin(params["enc2"], h))
    mu = lin(params["fc_mu"], h)
    log_var = lin(params["fc_var"], h)
    z = mu + eps * jnp.exp(0.5 * log_var)
    d = jax.nn.relu(lin(params["dec1"], z))
    d = jax.nn.relu(lin(params["dec2"], d))
    recon = lin(params["dec3"], d)
    return recon, mu, log_var


if __name__ == "__main__":
    key = jax.random.PRNGKey(0)
    k_params, k_x, k_eps = jax.random.split(key, 3)

    batch = 37            # deliberately not a multiple of 16 -> exercises padding
    input_dim = 16
    hidden_dim = 8
    latent_dim = LATENT_DIM

    params = init_financial_vae_params(k_params, input_dim, hidden_dim, latent_dim)
    x = jax.random.normal(k_x, (batch, input_dim), jnp.float32)
    eps = jax.random.normal(k_eps, (batch, latent_dim), jnp.float32)

    # tile_batch=32 -> tb=32, grid=(2,) at this small size (exercises the
    # pipeline and padding); for real workloads leave the default (4096).
    recon, mu, log_var = financial_vae_forward(params, x, eps, tile_batch=32)
    jax.block_until_ready((recon, mu, log_var))

    assert recon.shape == (batch, input_dim)
    assert mu.shape == (batch, latent_dim)
    assert log_var.shape == (batch, latent_dim)

    ref_recon, ref_mu, ref_logvar = _reference_forward(params, x, eps)
    assert jnp.allclose(recon, ref_recon, atol=5e-2, rtol=5e-2)
    assert jnp.allclose(mu, ref_mu, atol=5e-2, rtol=5e-2)
    assert jnp.allclose(log_var, ref_logvar, atol=5e-2, rtol=5e-2)

    print("KERNEL_OK")
</pallas_src>

<mosaic_0001>
module attributes {stable_mosaic.version = 11 : i64} {
  func.func @_vae_forward_kernel(%arg0: i32, %arg1: memref<32x16xbf16, #tpu.memory_space<vmem>>, %arg2: memref<32x4xf32, #tpu.memory_space<vmem>>, %arg3: memref<16x8xbf16, #tpu.memory_space<vmem>>, %arg4: memref<8x8xbf16, #tpu.memory_space<vmem>>, %arg5: memref<4x8xbf16, #tpu.memory_space<vmem>>, %arg6: memref<8x8xbf16, #tpu.memory_space<vmem>>, %arg7: memref<8x24xbf16, #tpu.memory_space<vmem>>, %arg8: memref<8x24xbf16, #tpu.memory_space<vmem>>, %arg9: memref<8x24xf32, #tpu.memory_space<vmem>>, %arg10: memref<32x24xbf16, #tpu.memory_space<vmem>>) attributes {dimension_semantics = [#tpu.dimension_semantics<parallel>], iteration_bounds = array<i64: 2>, scalar_prefetch = 0 : i64, scratch_operands = 0 : i64, tpu.core_type = #tpu.core_type<tc>, window_params = [{transform_indices = @transform_0, window_bounds = array<i64: 32, 16>}, {transform_indices = @transform_1, window_bounds = array<i64: 32, 4>}, {pipeline_mode = #tpu.pipeline_mode<synchronous>, transform_indices = @transform_2, window_bounds = array<i64: 16, 8>}, {pipeline_mode = #tpu.pipeline_mode<synchronous>, transform_indices = @transform_3, window_bounds = array<i64: 8, 8>}, {pipeline_mode = #tpu.pipeline_mode<synchronous>, transform_indices = @transform_4, window_bounds = array<i64: 4, 8>}, {pipeline_mode = #tpu.pipeline_mode<synchronous>, transform_indices = @transform_5, window_bounds = array<i64: 8, 8>}, {pipeline_mode = #tpu.pipeline_mode<synchronous>, transform_indices = @transform_6, window_bounds = array<i64: 8, 24>}, {pipeline_mode = #tpu.pipeline_mode<synchronous>, transform_indices = @transform_7, window_bounds = array<i64: 8, 24>}, {pipeline_mode = #tpu.pipeline_mode<synchronous>, transform_indices = @transform_8, window_bounds = array<i64: 8, 24>}, {transform_indices = @transform_9, window_bounds = array<i64: 32, 24>}]} {
    %c0 = arith.constant 0 : index
    %c0_0 = arith.constant 0 : index
    %0 = vector.load %arg1[%c0, %c0_0] : memref<32x16xbf16, #tpu.memory_space<vmem>>, vector<32x16xbf16>
    %c0_1 = arith.constant 0 : index
    %c0_2 = arith.constant 0 : index
    %1 = vector.load %arg9[%c0_1, %c0_2] : memref<8x24xf32, #tpu.memory_space<vmem>>, vector<8x24xf32>
    %2 = vector.extract_strided_slice %1 {offsets = [0, 0], sizes = [1, 8], strides = [1, 1]} : vector<8x24xf32> to vector<1x8xf32>
    %3 = vector.extract_strided_slice %1 {offsets = [1, 0], sizes = [1, 8], strides = [1, 1]} : vector<8x24xf32> to vector<1x8xf32>
    %4 = vector.extract_strided_slice %1 {offsets = [2, 0], sizes = [1, 8], strides = [1, 1]} : vector<8x24xf32> to vector<1x8xf32>
    %5 = vector.extract_strided_slice %1 {offsets = [3, 0], sizes = [1, 8], strides = [1, 1]} : vector<8x24xf32> to vector<1x8xf32>
    %6 = vector.extract_strided_slice %1 {offsets = [4, 0], sizes = [1, 24], strides = [1, 1]} : vector<8x24xf32> to vector<1x24xf32>
    %c0_3 = arith.constant 0 : index
    %c0_4 = arith.constant 0 : index
    %7 = vector.load %arg3[%c0_3, %c0_4] : memref<16x8xbf16, #tpu.memory_space<vmem>>, vector<16x8xbf16>
    %cst = arith.constant dense<0.000000e+00> : vector<32x8xf32>
    %8 = tpu.matmul %0, %7, %cst {dimension_numbers = #tpu.dot_dimension_numbers<[1], [0], [0], [1], [0, 0, 1, 1], [], []>} : vector<32x16xbf16>, vector<16x8xbf16>, vector<32x8xf32> -> vector<32x8xf32>
    %9 = vector.broadcast %2 : vector<1x8xf32> to vector<32x8xf32>
    %10 = arith.addf %8, %9 : vector<32x8xf32>
    %cst_5 = arith.constant 0.000000e+00 : f32
    %11 = vector.broadcast %cst_5 : f32 to vector<32x8xf32>
    %12 = arith.maximumf %10, %11 : vector<32x8xf32>
    %13 = arith.truncf %12 : vector<32x8xf32> to vector<32x8xbf16>
    %c0_6 = arith.constant 0 : index
    %c0_7 = arith.constant 0 : index
    %14 = vector.load %arg4[%c0_6, %c0_7] : memref<8x8xbf16, #tpu.memory_space<vmem>>, vector<8x8xbf16>
    %cst_8 = arith.constant dense<0.000000e+00> : vector<32x8xf32>
    %15 = tpu.matmul %13, %14, %cst_8 {dimension_numbers = #tpu.dot_dimension_numbers<[1], [0], [0], [1], [0, 0, 1, 1], [], []>} : vector<32x8xbf16>, vector<8x8xbf16>, vector<32x8xf32> -> vector<32x8xf32>
    %16 = vector.broadcast %3 : vector<1x8xf32> to vector<32x8xf32>
    %17 = arith.addf %15, %16 : vector<32x8xf32>
    %cst_9 = arith.constant 0.000000e+00 : f32
    %18 = vector.broadcast %cst_9 : f32 to vector<32x8xf32>
    %19 = arith.maximumf %17, %18 : vector<32x8xf32>
    %20 = arith.truncf %19 : vector<32x8xf32> to vector<32x8xbf16>
    %c0_10 = arith.constant 0 : index
    %c0_11 = arith.constant 0 : index
    %21 = vector.load %arg8[%c0_10, %c0_11] : memref<8x24xbf16, #tpu.memory_space<vmem>>, vector<8x24xbf16>
    %cst_12 = arith.constant dense<0.000000e+00> : vector<32x24xf32>
    %22 = tpu.matmul %20, %21, %cst_12 {dimension_numbers = #tpu.dot_dimension_numbers<[1], [0], [0], [1], [0, 0, 1, 1], [], []>} : vector<32x8xbf16>, vector<8x24xbf16>, vector<32x24xf32> -> vector<32x24xf32>
    %23 = vector.broadcast %6 : vector<1x24xf32> to vector<32x24xf32>
    %24 = arith.addf %22, %23 : vector<32x24xf32>
    %25 = vector.extract_strided_slice %24 {offsets = [0, 16], sizes = [32, 4], strides = [1, 1]} : vector<32x24xf32> to vector<32x4xf32>
    %26 = vector.extract_strided_slice %24 {offsets = [0, 20], sizes = [32, 4], strides = [1, 1]} : vector<32x24xf32> to vector<32x4xf32>
    %cst_13 = arith.constant 5.000000e-01 : f32
    %27 = vector.broadcast %cst_13 : f32 to vector<32x4xf32>
    %28 = arith.mulf %27, %26 : vector<32x4xf32>
    %29 = math.exp %28 : vector<32x4xf32>
    %c0_14 = arith.constant 0 : index
    %c0_15 = arith.constant 0 : index
    %30 = vector.load %arg2[%c0_14, %c0_15] : memref<32x4xf32, #tpu.memory_space<vmem>>, vector<32x4xf32>
    %31 = arith.mulf %30, %29 : vector<32x4xf32>
    %32 = arith.addf %25, %31 : vector<32x4xf32>
    %33 = arith.truncf %32 : vector<32x4xf32> to vector<32x4xbf16>
    %c0_16 = arith.constant 0 : index
    %c0_17 = arith.constant 0 : index
    %34 = vector.load %arg5[%c0_16, %c0_17] : memref<4x8xbf16, #tpu.memory_space<vmem>>, vector<4x8xbf16>
    %cst_18 = arith.constant dense<0.000000e+00> : vector<32x8xf32>
    %35 = tpu.matmul %33, %34, %cst_18 {dimension_numbers = #tpu.dot_dimension_numbers<[1], [0], [0], [1], [0, 0, 1, 1], [], []>} : vector<32x4xbf16>, vector<4x8xbf16>, vector<32x8xf32> -> vector<32x8xf32>
    %36 = vector.broadcast %4 : vector<1x8xf32> to vector<32x8xf32>
    %37 = arith.addf %35, %36 : vector<32x8xf32>
    %cst_19 = arith.constant 0.000000e+00 : f32
    %38 = vector.broadcast %cst_19 : f32 to vector<32x8xf32>
    %39 = arith.maximumf %37, %38 : vector<32x8xf32>
    %40 = arith.truncf %39 : vector<32x8xf32> to vector<32x8xbf16>
    %c0_20 = arith.constant 0 : index
    %c0_21 = arith.constant 0 : index
    %41 = vector.load %arg6[%c0_20, %c0_21] : memref<8x8xbf16, #tpu.memory_space<vmem>>, vector<8x8xbf16>
    %cst_22 = arith.constant dense<0.000000e+00> : vector<32x8xf32>
    %42 = tpu.matmul %40, %41, %cst_22 {dimension_numbers = #tpu.dot_dimension_numbers<[1], [0], [0], [1], [0, 0, 1, 1], [], []>} : vector<32x8xbf16>, vector<8x8xbf16>, vector<32x8xf32> -> vector<32x8xf32>
    %43 = vector.broadcast %5 : vector<1x8xf32> to vector<32x8xf32>
    %44 = arith.addf %42, %43 : vector<32x8xf32>
    %cst_23 = arith.constant 0.000000e+00 : f32
    %45 = vector.broadcast %cst_23 : f32 to vector<32x8xf32>
    %46 = arith.maximumf %44, %45 : vector<32x8xf32>
    %47 = arith.truncf %46 : vector<32x8xf32> to vector<32x8xbf16>
    %c0_24 = arith.constant 0 : index
    %c0_25 = arith.constant 0 : index
    %48 = vector.load %arg7[%c0_24, %c0_25] : memref<8x24xbf16, #tpu.memory_space<vmem>>, vector<8x24xbf16>
    %cst_26 = arith.constant dense<0.000000e+00> : vector<32x24xf32>
    %49 = tpu.matmul %47, %48, %cst_26 {dimension_numbers = #tpu.dot_dimension_numbers<[1], [0], [0], [1], [0, 0, 1, 1], [], []>} : vector<32x8xbf16>, vector<8x24xbf16>, vector<32x24xf32> -> vector<32x24xf32>
    %50 = arith.addf %49, %24 : vector<32x24xf32>
    %51 = arith.truncf %50 : vector<32x24xf32> to vector<32x24xbf16>
    %c0_27 = arith.constant 0 : index
    %c0_28 = arith.constant 0 : index
    %52 = vector.load %arg10[%c0_27, %c0_28] : memref<32x24xbf16, #tpu.memory_space<vmem>>, vector<32x24xbf16>
    tpu.vector_store %arg10[%c0_27, %c0_28], %51 {strides = array<i32>} : memref<32x24xbf16, #tpu.memory_space<vmem>>, vector<32x24xbf16>,
    return
  }
  func.func @transform_0(%arg0: i32) -> (i32, i32) {
    %c0_i32 = arith.constant 0 : i32
    %c0_i32_0 = arith.constant 0 : i32
    return %arg0, %c0_i32 : i32, i32
  }
  func.func @transform_1(%arg0: i32) -> (i32, i32) {
    %c0_i32 = arith.constant 0 : i32
    %c0_i32_0 = arith.constant 0 : i32
    return %arg0, %c0_i32 : i32, i32
  }
  func.func @transform_2(%arg0: i32) -> (i32, i32) {
    %c0_i32 = arith.constant 0 : i32
    %c0_i32_0 = arith.constant 0 : i32
    %c0_i32_1 = arith.constant 0 : i32
    return %c0_i32, %c0_i32_0 : i32, i32
  }
  func.func @transform_3(%arg0: i32) -> (i32, i32) {
    %c0_i32 = arith.constant 0 : i32
    %c0_i32_0 = arith.constant 0 : i32
    %c0_i32_1 = arith.constant 0 : i32
    return %c0_i32, %c0_i32_0 : i32, i32
  }
  func.func @transform_4(%arg0: i32) -> (i32, i32) {
    %c0_i32 = arith.constant 0 : i32
    %c0_i32_0 = arith.constant 0 : i32
    %c0_i32_1 = arith.constant 0 : i32
    return %c0_i32, %c0_i32_0 : i32, i32
  }
  func.func @transform_5(%arg0: i32) -> (i32, i32) {
    %c0_i32 = arith.constant 0 : i32
    %c0_i32_0 = arith.constant 0 : i32
    %c0_i32_1 = arith.constant 0 : i32
    return %c0_i32, %c0_i32_0 : i32, i32
  }
  func.func @transform_6(%arg0: i32) -> (i32, i32) {
    %c0_i32 = arith.constant 0 : i32
    %c0_i32_0 = arith.constant 0 : i32
    %c0_i32_1 = arith.constant 0 : i32
    return %c0_i32, %c0_i32_0 : i32, i32
  }
  func.func @transform_7(%arg0: i32) -> (i32, i32) {
    %c0_i32 = arith.constant 0 : i32
    %c0_i32_0 = arith.constant 0 : i32
    %c0_i32_1 = arith.constant 0 : i32
    return %c0_i32, %c0_i32_0 : i32, i32
  }
  func.func @transform_8(%arg0: i32) -> (i32, i32) {
    %c0_i32 = arith.constant 0 : i32
    %c0_i32_0 = arith.constant 0 : i32
    %c0_i32_1 = arith.constant 0 : i32
    return %c0_i32, %c0_i32_0 : i32, i32
  }
  func.func @transform_9(%arg0: i32) -> (i32, i32) {
    %c0_i32 = arith.constant 0 : i32
    %c0_i32_0 = arith.constant 0 : i32
    return %arg0, %c0_i32 : i32, i32
  }
}

</mosaic_0001>

<llo_original>
// kernel: tpu_custom_call.1
$region0: #{tpu_custom_call.1}
  #allocation0 [shape = 'u32[]', space=smem, size = 0x4, offset = 0x4, fixed_abs, tag = 'smem constant byte address 0x4 - core index']
  #allocation1 [shape = 'u32[72,128]{1,0:T(1,128)}', space=vmem, size = 0x9000, scoped, tag = 'internal scratch']
  %s0 = inlined_call_operand.vmem [shape: bf16[64,16], index: 0, kind: input, shape index: {}]
  %s1 = inlined_call_operand.vmem [shape: f32[64,4], index: 1, kind: input, shape index: {}]
  %s2 = inlined_call_operand.vmem [shape: bf16[16,8], index: 2, kind: input, shape index: {}]
  %s3 = inlined_call_operand.vmem [shape: bf16[8,8], index: 3, kind: input, shape index: {}]
  %s4 = inlined_call_operand.vmem [shape: bf16[4,8], index: 4, kind: input, shape index: {}]
  %s5 = inlined_call_operand.vmem [shape: bf16[8,8], index: 5, kind: input, shape index: {}]
  %s6 = inlined_call_operand.vmem [shape: bf16[8,24], index: 6, kind: input, shape index: {}]
  %s7 = inlined_call_operand.vmem [shape: bf16[8,24], index: 7, kind: input, shape index: {}]
  %s8 = inlined_call_operand.vmem [shape: f32[8,24], index: 8, kind: input, shape index: {}]
  %s9 = inlined_call_operand.vmem [shape: bf16[64,24], index: 9, kind: output, shape index: {}]
  %s10 = sld [smem:[#allocation0]]
  $region69: #{tpu_custom_call.1} parent=0
    _
  %s12 = ssub.s32 1, %s10
  %s13 = scalar_select 0, %s12, %s10
  loop: start=0, step=1, limit=4
  $region2: #{tpu_custom_call.1} parent=0 // loop_pre_header
    _
  $region3: #{tpu_custom_call.1} parent=0 // loop_header
    %s15 = sphi 0, %s19
    %p16 = scmp.ge.s32.totalorder %s15, 4
    %s25 = sphi 0, %s27
    %s28 = sphi 0, %s25
    %s29 = sphi 0, %s28
    %s45 = sphi 0, %s29
    %s51 = sphi 0, %s53
    %s54 = sphi 0, %s51
    %s55 = sphi 0, %s54
    %s71 = sphi 0, %s55
    %s75 = sphi 0, %s75
    %s77 = sphi 0, %s75
    %s78 = sphi 0, %s77
    %s92 = sphi 0, %s78
    %s96 = sphi 0, %s96
    %s98 = sphi 0, %s96
    %s99 = sphi 0, %s98
    %s113 = sphi 0, %s99
    %s117 = sphi 0, %s117
    %s119 = sphi 0, %s117
    %s120 = sphi 0, %s119
    %s134 = sphi 0, %s120
    %s138 = sphi 0, %s138
    %s140 = sphi 0, %s138
    %s141 = sphi 0, %s140
    %s155 = sphi 0, %s141
    %s159 = sphi 0, %s159
    %s161 = sphi 0, %s159
    %s162 = sphi 0, %s161
    %s176 = sphi 0, %s162
    %s180 = sphi 0, %s180
    %s182 = sphi 0, %s180
    %s183 = sphi 0, %s182
    %s197 = sphi 0, %s183
    %s201 = sphi 0, %s201
    %s203 = sphi 0, %s201
    %s204 = sphi 0, %s203
    %s218 = sphi 0, %s204
    %s224 = sphi 0, %s226
    %s227 = sphi 0, %s224
    %s228 = sphi 0, %s227
    %s244 = sphi 0, %s228
  $region4: #{tpu_custom_call.1} parent=0 // loop_header_branch
    %18 = sbr.rel (%p16) target = $region8
  $region5: #{tpu_custom_call.1} parent=0 // loop_body
    %s20 = ssub.s32 %s15, 1
    %s21 = ssub.s32 %s15, 2
    %s22 = sadd.s32 %s15, 1
    %s23 = ssub.s32 %s15, %s22
    %p24 = scmp.eq.s32.totalorder %s23, 0
    %s26 = sadd.s32 %s25, 1
    %s27 = scalar_select %p24, %s25, %s26
    %p30 = pneg %p24
    %p31 = scmp.eq.s32.totalorder %s15, 1
    %p32 = por %p30, %p31
    %p33 = scmp.ne.s32.totalorder %s25, %s28
    %p34 = scmp.eq.s32.totalorder %s15, 0
    %p35 = por %p33, %p34
    %p36 = scmp.ne.s32.totalorder %s25, %s28
    %p37 = scmp.eq.s32.totalorder %s20, 1
    %p38 = por %p36, %p37
    %p39 = scmp.ne.s32.totalorder %s28, %s29
    %p40 = scmp.eq.s32.totalorder %s20, 0
    %p41 = por %p39, %p40
    %p42 = scmp.ne.s32.totalorder %s28, %s29
    %p43 = scmp.eq.s32.totalorder %s21, 1
    %p44 = por %p42, %p43
    %p46 = scmp.ne.s32.totalorder %s29, %s45
    %p47 = scmp.eq.s32.totalorder %s21, 0
    %p48 = por %p46, %p47
    %s49 = ssub.s32 %s15, %s22
    %p50 = scmp.eq.s32.totalorder %s49, 0
    %s52 = sadd.s32 %s51, 1
    %s53 = scalar_select %p50, %s51, %s52
    %p56 = pneg %p50
    %p57 = scmp.eq.s32.totalorder %s15, 1
    %p58 = por %p56, %p57
    %p59 = scmp.ne.s32.totalorder %s51, %s54
    %p60 = scmp.eq.s32.totalorder %s15, 0
    %p61 = por %p59, %p60
    %p62 = scmp.ne.s32.totalorder %s51, %s54
    %p63 = scmp.eq.s32.totalorder %s20, 1
    %p64 = por %p62, %p63
    %p65 = scmp.ne.s32.totalorder %s54, %s55
    %p66 = scmp.eq.s32.totalorder %s20, 0
    %p67 = por %p65, %p66
    %p68 = scmp.ne.s32.totalorder %s54, %s55
    %p69 = scmp.eq.s32.totalorder %s21, 1
    %p70 = por %p68, %p69
    %p72 = scmp.ne.s32.totalorder %s55, %s71
    %p73 = scmp.eq.s32.totalorder %s21, 0
    %p74 = por %p72, %p73
    %s76 = sadd.s32 %s75, 1
    %p79 = scmp.eq.s32.totalorder %s15, 1
    %p80 = scmp.ne.s32.totalorder %s75, %s77
    %p81 = scmp.eq.s32.totalorder %s15, 0
    %p82 = por %p80, %p81
    %p83 = scmp.ne.s32.totalorder %s75, %s77
    %p84 = scmp.eq.s32.totalorder %s20, 1
    %p85 = por %p83, %p84
    %p86 = scmp.ne.s32.totalorder %s77, %s78
    %p87 = scmp.eq.s32.totalorder %s20, 0
    %p88 = por %p86, %p87
    %p89 = scmp.ne.s32.totalorder %s77, %s78
    %p90 = scmp.eq.s32.totalorder %s21, 1
    %p91 = por %p89, %p90
    %p93 = scmp.ne.s32.totalorder %s78, %s92
    %p94 = scmp.eq.s32.totalorder %s21, 0
    %p95 = por %p93, %p94
    %s97 = sadd.s32 %s96, 1
    %p100 = scmp.eq.s32.totalorder %s15, 1
    %p101 = scmp.ne.s32.totalorder %s96, %s98
    %p102 = scmp.eq.s32.totalorder %s15, 0
    %p103 = por %p101, %p102
    %p104 = scmp.ne.s32.totalorder %s96, %s98
    %p105 = scmp.eq.s32.totalorder %s20, 1
    %p106 = por %p104, %p105
    %p107 = scmp.ne.s32.totalorder %s98, %s99
    %p108 = scmp.eq.s32.totalorder %s20, 0
    %p109 = por %p107, %p108
    %p110 = scmp.ne.s32.totalorder %s98, %s99
    %p111 = scmp.eq.s32.totalorder %s21, 1
    %p112 = por %p110, %p111
    %p114 = scmp.ne.s32.totalorder %s99, %s113
    %p115 = scmp.eq.s32.totalorder %s21, 0
    %p116 = por %p114, %p115
    %s118 = sadd.s32 %s117, 1
    %p121 = scmp.eq.s32.totalorder %s15, 1
    %p122 = scmp.ne.s32.totalorder %s117, %s119
    %p123 = scmp.eq.s32.totalorder %s15, 0
    %p124 = por %p122, %p123
    %p125 = scmp.ne.s32.totalorder %s117, %s119
    %p126 = scmp.eq.s32.totalorder %s20, 1
    %p127 = por %p125, %p126
    %p128 = scmp.ne.s32.totalorder %s119, %s120
    %p129 = scmp.eq.s32.totalorder %s20, 0
    %p130 = por %p128, %p129
    %p131 = scmp.ne.s32.totalorder %s119, %s120
    %p132 = scmp.eq.s32.totalorder %s21, 1
    %p133 = por %p131, %p132
    %p135 = scmp.ne.s32.totalorder %s120, %s134
    %p136 = scmp.eq.s32.totalorder %s21, 0
    %p137 = por %p135, %p136
    %s139 = sadd.s32 %s138, 1
    %p142 = scmp.eq.s32.totalorder %s15, 1
    %p143 = scmp.ne.s32.totalorder %s138, %s140
    %p144 = scmp.eq.s32.totalorder %s15, 0
    %p145 = por %p143, %p144
    %p146 = scmp.ne.s32.totalorder %s138, %s140
    %p147 = scmp.eq.s32.totalorder %s20, 1
    %p148 = por %p146, %p147
    %p149 = scmp.ne.s32.totalorder %s140, %s141
    %p150 = scmp.eq.s32.totalorder %s20, 0
    %p151 = por %p149, %p150
    %p152 = scmp.ne.s32.totalorder %s140, %s141
    %p153 = scmp.eq.s32.totalorder %s21, 1
    %p154 = por %p152, %p153
    %p156 = scmp.ne.s32.totalorder %s141, %s155
    %p157 = scmp.eq.s32.totalorder %s21, 0
    %p158 = por %p156, %p157
    %s160 = sadd.s32 %s159, 1
    %p163 = scmp.eq.s32.totalorder %s15, 1
    %p164 = scmp.ne.s32.totalorder %s159, %s161
    %p165 = scmp.eq.s32.totalorder %s15, 0
    %p166 = por %p164, %p165
    %p167 = scmp.ne.s32.totalorder %s159, %s161
    %p168 = scmp.eq.s32.totalorder %s20, 1
    %p169 = por %p167, %p168
    %p170 = scmp.ne.s32.totalorder %s161, %s162
    %p171 = scmp.eq.s32.totalorder %s20, 0
    %p172 = por %p170, %p171
    %p173 = scmp.ne.s32.totalorder %s161, %s162
    %p174 = scmp.eq.s32.totalorder %s21, 1
    %p175 = por %p173, %p174
    %p177 = scmp.ne.s32.totalorder %s162, %s176
    %p178 = scmp.eq.s32.totalorder %s21, 0
    %p179 = por %p177, %p178
    %s181 = sadd.s32 %s180, 1
    %p184 = scmp.eq.s32.totalorder %s15, 1
    %p185 = scmp.ne.s32.totalorder %s180, %s182
    %p186 = scmp.eq.s32.totalorder %s15, 0
    %p187 = por %p185, %p186
    %p188 = scmp.ne.s32.totalorder %s180, %s182
    %p189 = scmp.eq.s32.totalorder %s20, 1
    %p190 = por %p188, %p189
    %p191 = scmp.ne.s32.totalorder %s182, %s183
    %p192 = scmp.eq.s32.totalorder %s20, 0
    %p193 = por %p191, %p192
    %p194 = scmp.ne.s32.totalorder %s182, %s183
    %p195 = scmp.eq.s32.totalorder %s21, 1
    %p196 = por %p194, %p195
    %p198 = scmp.ne.s32.totalorder %s183, %s197
    %p199 = scmp.eq.s32.totalorder %s21, 0
    %p200 = por %p198, %p199
    %s202 = sadd.s32 %s201, 1
    %p205 = scmp.eq.s32.totalorder %s15, 1
    %p206 = scmp.ne.s32.totalorder %s201, %s203
    %p207 = scmp.eq.s32.totalorder %s15, 0
    %p208 = por %p206, %p207
    %p209 = scmp.ne.s32.totalorder %s201, %s203
    %p210 = scmp.eq.s32.totalorder %s20, 1
    %p211 = por %p209, %p210
    %p212 = scmp.ne.s32.totalorder %s203, %s204
    %p213 = scmp.eq.s32.totalorder %s20, 0
    %p214 = por %p212, %p213
    %p215 = scmp.ne.s32.totalorder %s203, %s204
    %p216 = scmp.eq.s32.totalorder %s21, 1
    %p217 = por %p215, %p216
    %p219 = scmp.ne.s32.totalorder %s204, %s218
    %p220 = scmp.eq.s32.totalorder %s21, 0
    %p221 = por %p219, %p220
    %s222 = ssub.s32 %s15, %s22
    %p223 = scmp.eq.s32.totalorder %s222, 0
    %s225 = sadd.s32 %s224, 1
    %s226 = scalar_select %p223, %s224, %s225
    %p229 = pneg %p223
    %p230 = scmp.eq.s32.totalorder %s15, 1
    %p231 = por %p229, %p230
    %p232 = scmp.ne.s32.totalorder %s224, %s227
    %p233 = scmp.eq.s32.totalorder %s15, 0
    %p234 = por %p232, %p233
    %p235 = scmp.ne.s32.totalorder %s224, %s227
    %p236 = scmp.eq.s32.totalorder %s20, 1
    %p237 = por %p235, %p236
    %p238 = scmp.ne.s32.totalorder %s227, %s228
    %p239 = scmp.eq.s32.totalorder %s20, 0
    %p240 = por %p238, %p239
    %p241 = scmp.ne.s32.totalorder %s227, %s228
    %p242 = scmp.eq.s32.totalorder %s21, 1
    %p243 = por %p241, %p242
    %p245 = scmp.ne.s32.totalorder %s228, %s244
    %p246 = scmp.eq.s32.totalorder %s21, 0
    %p247 = por %p245, %p246
    %p248 = scmp.le.s32.totalorder 1, %s15
    %p249 = scmp.lt.s32.totalorder %s15, 3
    %p250 = pnand %p248, %p249
    %p251 = pneg %p250
    // Predicated region
    $region9: #{tpu_custom_call.1} parent=5 // pred_check
      _
    $region10: #{tpu_custom_call.1} parent=5 // pred_check_branch
      %253 = sbr.rel (%p250) target = $region12
    $region11: #{tpu_custom_call.1} parent=5 // pred_region
      %s254 = ssub.s32 %s15, 1
      // Predicated region
      $region13: #{tpu_custom_call.1} parent=11 // pred_check
        %p255 = pneg %p88
      $region14: #{tpu_custom_call.1} parent=11 // pred_check_branch
        %257 = sbr.rel (%p255) target = $region16
      $region15: #{tpu_custom_call.1} parent=11 // pred_region
        _
      $region16: #{tpu_custom_call.1} parent=11 // pred_fallthru
        _
      // Predicated region
      $region17: #{tpu_custom_call.1} parent=11 // pred_check
        %p258 = pneg %p109
      $region18: #{tpu_custom_call.1} parent=11 // pred_check_branch
        %260 = sbr.rel (%p258) target = $region20
      $region19: #{tpu_custom_call.1} parent=11 // pred_region
        _
      $region20: #{tpu_custom_call.1} parent=11 // pred_fallthru
        _
      // Predicated region
      $region21: #{tpu_custom_call.1} parent=11 // pred_check
        %p261 = pneg %p130
      $region22: #{tpu_custom_call.1} parent=11 // pred_check_branch
        %263 = sbr.rel (%p261) target = $region24
      $region23: #{tpu_custom_call.1} parent=11 // pred_region
        _
      $region24: #{tpu_custom_call.1} parent=11 // pred_fallthru
        _
      // Predicated region
      $region25: #{tpu_custom_call.1} parent=11 // pred_check
        %p264 = pneg %p151
      $region26: #{tpu_custom_call.1} parent=11 // pred_check_branch
        %266 = sbr.rel (%p264) target = $region28
      $region27: #{tpu_custom_call.1} parent=11 // pred_region
        _
      $region28: #{tpu_custom_call.1} parent=11 // pred_fallthru
        _
      // Predicated region
      $region29: #{tpu_custom_call.1} parent=11 // pred_check
        %p267 = pneg %p172
      $region30: #{tpu_custom_call.1} parent=11 // pred_check_branch
        %269 = sbr.rel (%p267) target = $region32
      $region31: #{tpu_custom_call.1} parent=11 // pred_region
        _
      $region32: #{tpu_custom_call.1} parent=11 // pred_fallthru
        _
      // Predicated region
      $region33: #{tpu_custom_call.1} parent=11 // pred_check
        %p270 = pneg %p193
      $region34: #{tpu_custom_call.1} parent=11 // pred_check_branch
        %272 = sbr.rel (%p270) target = $region36
      $region35: #{tpu_custom_call.1} parent=11 // pred_region
        _
      $region36: #{tpu_custom_call.1} parent=11 // pred_fallthru
        _
      // Predicated region
      $region37: #{tpu_custom_call.1} parent=11 // pred_check
        %p273 = pneg %p214
      $region38: #{tpu_custom_call.1} parent=11 // pred_check_branch
        %275 = sbr.rel (%p273) target = $region40
      $region39: #{tpu_custom_call.1} parent=11 // pred_region
        _
      $region40: #{tpu_custom_call.1} parent=11 // pred_fallthru
        _
    $region12: #{tpu_custom_call.1} parent=5 // pred_fallthru
      _
    %p276 = scmp.lt.s32.totalorder %s15, 2
    // Predicated region
    $region41: #{tpu_custom_call.1} parent=5 // pred_check
      %p277 = pneg %p276
    $region42: #{tpu_custom_call.1} parent=5 // pred_check_branch
      %279 = sbr.rel (%p277) target = $region44
    $region43: #{tpu_custom_call.1} parent=5 // pred_region
      // Predicated region
      $region45: #{tpu_custom_call.1} parent=43 // pred_check
        %p280 = pneg %p35
      $region46: #{tpu_custom_call.1} parent=43 // pred_check_branch
        %282 = sbr.rel (%p280) target = $region48
      $region47: #{tpu_custom_call.1} parent=43 // pred_region
        %s283 = smul.u32 4, %s15
        %p284 = scmp.lt.s32.totalorder %s283, 7
        %s285 = scalar_select %p284, %s283, 7
        %s286 = smul.addr %s285, 4
        %s287 = scalar_lea.vmem %s0, %s286
        %s288 = smul.u32 4, %s15
      $region48: #{tpu_custom_call.1} parent=43 // pred_fallthru
        _
      // Predicated region
      $region49: #{tpu_custom_call.1} parent=43 // pred_check
        %p289 = pneg %p61
      $region50: #{tpu_custom_call.1} parent=43 // pred_check_branch
        %291 = sbr.rel (%p289) target = $region52
      $region51: #{tpu_custom_call.1} parent=43 // pred_region
        %s292 = smul.u32 4, %s15
        %p293 = scmp.lt.s32.totalorder %s292, 7
        %s294 = scalar_select %p293, %s292, 7
        %s295 = smul.addr %s294, 8
        %s296 = scalar_lea.vmem %s1, %s295
        %s297 = smul.u32 4, %s15
      $region52: #{tpu_custom_call.1} parent=43 // pred_fallthru
        _
    $region44: #{tpu_custom_call.1} parent=5 // pred_fallthru
      _
    %p298 = scmp.le.s32.totalorder 1, %s15
    %p299 = scmp.lt.s32.totalorder %s15, 3
    %p300 = pnand %p298, %p299
    %p301 = pneg %p300
    // Predicated region
    $region53: #{tpu_custom_call.1} parent=5 // pred_check
      _
    $region54: #{tpu_custom_call.1} parent=5 // pred_check_branch
      %303 = sbr.rel (%p300) target = $region56
    $region55: #{tpu_custom_call.1} parent=5 // pred_region
      %s304 = ssub.s32 %s15, 1
      %s305 = smul.u32 4, %s20
      %p306 = scmp.lt.s32.totalorder %s305, 7
      %s307 = scalar_select %p306, %s305, 7
      %s308 = smul.addr %s307, 4
      %s309 = scalar_lea.vmem %s0, %s308
      %p310 = pneg %p41
      %p311 = pneg %p38
      %s312 = smul.u32 4, %s20
      %p313 = scmp.lt.s32.totalorder %s312, 7
      %s314 = scalar_select %p313, %s312, 7
      %s315 = smul.addr %s314, 8
      %s316 = scalar_lea.vmem %s1, %s315
      %p317 = pneg %p67
      %p318 = pneg %p64
      %p319 = pneg %p88
      %p320 = pneg %p85
      %p321 = pneg %p109
      %p322 = pneg %p106
      %p323 = pneg %p130
      %p324 = pneg %p127
      %p325 = pneg %p151
      %p326 = pneg %p148
      %p327 = pneg %p172
      %p328 = pneg %p169
      %p329 = pneg %p193
      %p330 = pneg %p190
      %p331 = pneg %p214
      %p332 = pneg %p211
      %p333 = pneg %p240
      %p334 = pneg %p237
      %s335 = smul.u32 4, %s20
      %p336 = scmp.lt.s32.totalorder %s335, 7
      %s337 = scalar_select %p336, %s335, 7
      %s338 = smul.addr %s337, 4
      %s339 = scalar_lea.vmem %s9, %s338
      %s340 = smul.u32 4, %s20
      %p341 = scmp.lt.s32.totalorder %s340, 7
      %s342 = scalar_select %p341, %s340, 7
      %s343 = smul.addr %s342, 4
      %s344 = scalar_lea.vmem %s0, %s343
      %s345 = smul.u32 4, %s20
      %s346 = smul.u32 4, %s20
      %p347 = scmp.lt.s32.totalorder %s346, 7
      %s348 = scalar_select %p347, %s346, 7
      %s349 = smul.addr %s348, 8
      %s350 = scalar_lea.vmem %s1, %s349
      %s351 = smul.u32 4, %s20
      %s352 = smul.u32 4, %s20
      %p353 = scmp.lt.s32.totalorder %s352, 7
      %s354 = scalar_select %p353, %s352, 7
      %s355 = smul.addr %s354, 4
      %s356 = scalar_lea.vmem %s9, %s355
      %s357 = smul.u32 4, %s20
      %v359 = vld [vmem:[%s344] sm:$0xf]
      %v360 = vld [vmem:[%s344 + $0x4] sm:$0xf]
      %v361 = vld [vmem:[%s344 + $0x8] sm:$0xf]
      %v362 = vld [vmem:[%s344 + $0xc] sm:$0xf]
      %v363 = vld [vmem:[%s8] sm:$0xff]
      %v364 = vld [vmem:[%s2] sm:$0xf]
      %v365 = vld [vmem:[%s2 + $0x4] sm:$0xf]
      %v366 = vperm.slane %v363, 0
      %v371 = vunpack.c.l.b16 %v359
      %v372 = vunpack.c.l.b16 %v360
      %v373 = vunpack.c.l.b16 %v361
      %v374 = vunpack.c.l.b16 %v362
      %v375 = vpack.c.b16 %v372, %v371
      %v376 = vpack.c.b16 %v374, %v373
      %v379 = vunpack.c.l.b16 %v364
      %v380 = vunpack.c.l.b16 %v365
      %v381 = vpack.c.b16 %v380, %v379
      %vm383 = vcmask 130048
      %v385 = vsel %vm383, %v375, 0
      %v388 = vsel %vm383, %v376, 0
      %390 = vmatpush.bf16.msra.mxu0 0
      %391 = vmatpush.bf16.msra.mxu0 0
      %392 = vmatpush.bf16.msra.mxu0 0
      %393 = vmatpush.bf16.msra.mxu0 0
      %394 = vmatpush.bf16.msra.mxu0 0
      %395 = vmatpush.bf16.msra.mxu0 0
      %396 = vmatpush.bf16.msra.mxu0 0
      %397 = vmatpush.bf16.msra.mxu0 %v381
      %398 = vmatmul.bf16.gmra.mxu0 %v385
      %v399 = vpop.f32.mrf.mxu0
      %v400 = vadd.f32 %v366, %v399
      %v401 = vpop.f32.mrf.mxu0
      %v402 = vadd.f32 %v366, %v401
      %403 = vmatmul.bf16.gmra.mxu0 %v388
      %v404 = vpop.f32.mrf.mxu0
      %v405 = vadd.f32 %v366, %v404
      %v406 = vpop.f32.mrf.mxu0
      %v407 = vadd.f32 %v366, %v406
      %408 = vdwg.mxu0
      %v409 = vmax.f32 %v400, 0.0
      %v410 = vmax.f32 %v402, 0.0
      %v411 = vmax.f32 %v405, 0.0
      %v412 = vmax.f32 %v407, 0.0
      %v413 = vpack.c.bf16 %v410, %v409
      %v414 = vpack.c.bf16 %v412, %v411
      %v415 = vld [vmem:[%s3] sm:$0xf]
      %v416 = vperm.slane %v363, 1
      %vm417 = vcmask 64512
      %v419 = vsel %vm417, %v413, 0
      %v422 = vsel %vm417, %v414, 0
      %vm424 = vcmask 1043456
      %v426 = vsel %vm424, %v415, 0
      %428 = vmatpush.bf16.msra.mxu0 0
      %429 = vmatpush.bf16.msra.mxu0 0
      %430 = vmatpush.bf16.msra.mxu0 0
      %431 = vmatpush.bf16.msra.mxu0 0
      %432 = vmatpush.bf16.msra.mxu0 0
      %433 = vmatpush.bf16.msra.mxu0 0
      %434 = vmatpush.bf16.msra.mxu0 0
      %435 = vmatpush.bf16.msra.mxu0 %v426
      %436 = vmatmul.bf16.gmra.mxu0 %v419
      %v437 = vpop.f32.mrf.mxu0
      %v438 = vadd.f32 %v416, %v437
      %v439 = vpop.f32.mrf.mxu0
      %v440 = vadd.f32 %v416, %v439
      %441 = vmatmul.bf16.gmra.mxu0 %v422
      %v442 = vpop.f32.mrf.mxu0
      %v443 = vadd.f32 %v416, %v442
      %v444 = vpop.f32.mrf.mxu0
      %v445 = vadd.f32 %v416, %v444
      %446 = vdwg.mxu0
      %v447 = vmax.f32 %v438, 0.0
      %v448 = vmax.f32 %v440, 0.0
      %v449 = vmax.f32 %v443, 0.0
      %v450 = vmax.f32 %v445, 0.0
      %v451 = vpack.c.bf16 %v448, %v447
      %v452 = vpack.c.bf16 %v450, %v449
      %v453 = vld [vmem:[%s7] sm:$0xf]
      %v454 = vperm.slane %v363, 4
      %v456 = vsel %vm417, %v451, 0
      %v459 = vsel %vm417, %v452, 0
      %v462 = vsel %vm424, %v453, 0
      %464 = vmatpush.bf16.msra.mxu0 0
      %465 = vmatpush.bf16.msra.mxu0 0
      %466 = vmatpush.bf16.msra.mxu0 0
      %467 = vmatpush.bf16.msra.mxu0 0
      %468 = vmatpush.bf16.msra.mxu0 0
      %469 = vmatpush.bf16.msra.mxu0 0
      %470 = vmatpush.bf16.msra.mxu0 0
      %471 = vmatpush.bf16.msra.mxu0 %v462
      %472 = vmatmul.bf16.gmra.mxu0 %v456
      %v473 = vpop.f32.mrf.mxu0
      %v474 = vadd.f32 %v454, %v473
      %v475 = vpop.f32.mrf.mxu0
      %v476 = vadd.f32 %v454, %v475
      %477 = vmatmul.bf16.gmra.mxu0 %v459
      %v478 = vpop.f32.mrf.mxu0
      %v479 = vadd.f32 %v454, %v478
      %v480 = vpop.f32.mrf.mxu0
      %v481 = vadd.f32 %v454, %v480
      %482 = vdwg.mxu0
      %v483 = vmul.f32 %v474, 0.5
      %v484 = vmul.f32 %v476, 0.5
      %v485 = vmul.f32 %v479, 0.5
      %v486 = vmul.f32 %v481, 0.5
      %v487 = vmul.f32 %v483, 1.442695
      %v488 = vpow.pop %v487
      %v489 = vmul.f32 %v484, 1.442695
      %v490 = vpow.pop %v489
      %v491 = vmul.f32 %v485, 1.442695
      %v492 = vpow.pop %v491
      %v493 = vmul.f32 %v486, 1.442695
      %v494 = vpow.pop %v493
      %v495 = vld [vmem:[%s350] sm:$0xff]
      %v496 = vld [vmem:[%s350 + $0x8] sm:$0xff]
      %v497 = vld [vmem:[%s350 + $0x10] sm:$0xff]
      %v498 = vld [vmem:[%s350 + $0x18] sm:$0xff]
      %503 = vrot.lane.b32.xlu0 %v488, 108
      %v504 = vpop.permute.xlu0 %503
      %505 = vrot.lane.b32.xlu0 %v490, 108
      %v506 = vpop.permute.xlu0 %505
      %507 = vrot.lane.b32.xlu0 %v492, 108
      %v508 = vpop.permute.xlu0 %507
      %509 = vrot.lane.b32.xlu0 %v494, 108
      %v510 = vpop.permute.xlu0 %509
      %v515 = vmul.f32 %v495, %v504
      %v516 = vmul.f32 %v496, %v506
      %v517 = vmul.f32 %v497, %v508
      %v518 = vmul.f32 %v498, %v510
      %523 = vrot.lane.b32.xlu0 %v515, 16
      %v524 = vpop.permute.xlu0 %523
      %525 = vrot.lane.b32.xlu0 %v516, 16
      %v526 = vpop.permute.xlu0 %525
      %527 = vrot.lane.b32.xlu0 %v517, 16
      %v528 = vpop.permute.xlu0 %527
      %529 = vrot.lane.b32.xlu0 %v518, 16
      %v530 = vpop.permute.xlu0 %529
      %v535 = vadd.f32 %v474, %v524
      %v536 = vadd.f32 %v476, %v526
      %v537 = vadd.f32 %v479, %v528
      %v538 = vadd.f32 %v481, %v530
      %v539 = vpack.c.bf16 %v536, %v535
      %v540 = vpack.c.bf16 %v538, %v537
      %v541 = vld [vmem:[%s4] sm:$0x3]
      %v542 = vperm.slane %v363, 2
      %545 = vrot.lane.b32.xlu0 %v539, 112
      %v546 = vpop.permute.xlu0 %545
      %547 = vrot.lane.b32.xlu0 %v540, 112
      %v548 = vpop.permute.xlu0 %547
      %vm549 = vcmask 31744
      %v551 = vsel %vm549, %v546, 0
      %v554 = vsel %vm549, %v548, 0
      %vm556 = vcmask 1041408
      %v558 = vsel %vm556, %v541, 0
      %560 = vmatpush.bf16.msra.mxu0 0
      %561 = vmatpush.bf16.msra.mxu0 0
      %562 = vmatpush.bf16.msra.mxu0 0
      %563 = vmatpush.bf16.msra.mxu0 0
      %564 = vmatpush.bf16.msra.mxu0 0
      %565 = vmatpush.bf16.msra.mxu0 0
      %566 = vmatpush.bf16.msra.mxu0 0
      %567 = vmatpush.bf16.msra.mxu0 %v558
      %568 = vmatmul.bf16.gmra.mxu0 %v551
      %v569 = vpop.f32.mrf.mxu0
      %v570 = vadd.f32 %v542, %v569
      %v571 = vpop.f32.mrf.mxu0
      %v572 = vadd.f32 %v542, %v571
      %573 = vmatmul.bf16.gmra.mxu0 %v554
      %v574 = vpop.f32.mrf.mxu0
      %v575 = vadd.f32 %v542, %v574
      %v576 = vpop.f32.mrf.mxu0
      %v577 = vadd.f32 %v542, %v576
      %578 = vdwg.mxu0
      %v579 = vmax.f32 %v570, 0.0
      %v580 = vmax.f32 %v572, 0.0
      %v581 = vmax.f32 %v575, 0.0
      %v582 = vmax.f32 %v577, 0.0
      %v583 = vpack.c.bf16 %v580, %v579
      %v584 = vpack.c.bf16 %v582, %v581
      %v585 = vld [vmem:[%s5] sm:$0xf]
      %v586 = vperm.slane %v363, 3
      %v588 = vsel %vm417, %v583, 0
      %v591 = vsel %vm417, %v584, 0
      %v594 = vsel %vm424, %v585, 0
      %596 = vmatpush.bf16.msra.mxu0 0
      %597 = vmatpush.bf16.msra.mxu0 0
      %598 = vmatpush.bf16.msra.mxu0 0
      %599 = vmatpush.bf16.msra.mxu0 0
      %600 = vmatpush.bf16.msra.mxu0 0
      %601 = vmatpush.bf16.msra.mxu0 0
      %602 = vmatpush.bf16.msra.mxu0 0
      %603 = vmatpush.bf16.msra.mxu0 %v594
      %604 = vmatmul.bf16.gmra.mxu0 %v588
      %v605 = vpop.f32.mrf.mxu0
      %v606 = vadd.f32 %v586, %v605
      %v607 = vpop.f32.mrf.mxu0
      %v608 = vadd.f32 %v586, %v607
      %609 = vmatmul.bf16.gmra.mxu0 %v591
      %v610 = vpop.f32.mrf.mxu0
      %v611 = vadd.f32 %v586, %v610
      %v612 = vpop.f32.mrf.mxu0
      %v613 = vadd.f32 %v586, %v612
      %614 = vdwg.mxu0
      %v615 = vmax.f32 %v606, 0.0
      %v616 = vmax.f32 %v608, 0.0
      %v617 = vmax.f32 %v611, 0.0
      %v618 = vmax.f32 %v613, 0.0
      %v619 = vpack.c.bf16 %v616, %v615
      %v620 = vpack.c.bf16 %v618, %v617
      %v621 = vld [vmem:[%s6] sm:$0xf]
      %v623 = vsel %vm417, %v619, 0
      %v626 = vsel %vm417, %v620, 0
      %v629 = vsel %vm424, %v621, 0
      %631 = vmatpush.bf16.msra.mxu0 0
      %632 = vmatpush.bf16.msra.mxu0 0
      %633 = vmatpush.bf16.msra.mxu0 0
      %634 = vmatpush.bf16.msra.mxu0 0
      %635 = vmatpush.bf16.msra.mxu0 0
      %636 = vmatpush.bf16.msra.mxu0 0
      %637 = vmatpush.bf16.msra.mxu0 0
      %638 = vmatpush.bf16.msra.mxu0 %v629
      %639 = vmatmul.bf16.gmra.mxu0 %v623
      %v640 = vpop.f32.mrf.mxu0
      %v641 = vadd.f32 %v474, %v640
      %v642 = vpop.f32.mrf.mxu0
      %v643 = vadd.f32 %v476, %v642
      %644 = vmatmul.bf16.gmra.mxu0 %v626
      %v645 = vpop.f32.mrf.mxu0
      %v646 = vadd.f32 %v479, %v645
      %v647 = vpop.f32.mrf.mxu0
      %v648 = vadd.f32 %v481, %v647
      %649 = vdwg.mxu0
      %v650 = vpack.c.bf16 %v641, %v641
      %v651 = vpack.c.bf16 %v643, %v643
      %v652 = vpack.c.bf16 %v646, %v646
      %v653 = vpack.c.bf16 %v648, %v648
      %vm654 = vcmask 191488
      %655 = vst.msk [vmem:[%s356] sm:$0xf] %vm654, %v650
      %656 = vst.msk [vmem:[%s356 + $0x4] sm:$0xf] %vm654, %v651
      %657 = vst.msk [vmem:[%s356 + $0x8] sm:$0xf] %vm654, %v652
      %658 = vst.msk [vmem:[%s356 + $0xc] sm:$0xf] %vm654, %v653
      %s659 = smul.u32 4, %s20
      %p660 = scmp.lt.s32.totalorder %s659, 7
      %s661 = scalar_select %p660, %s659, 7
      %s662 = smul.addr %s661, 4
      %s663 = scalar_lea.vmem %s9, %s662
      // Predicated region
      $region57: #{tpu_custom_call.1} parent=55 // pred_check
        %p664 = pneg %p237
      $region58: #{tpu_custom_call.1} parent=55 // pred_check_branch
        %666 = sbr.rel (%p664) target = $region60
      $region59: #{tpu_custom_call.1} parent=55 // pred_region
        %s667 = smul.u32 4, %s20
      $region60: #{tpu_custom_call.1} parent=55 // pred_fallthru
        _
    $region56: #{tpu_custom_call.1} parent=5 // pred_fallthru
      _
    %p668 = scmp.le.s32.totalorder 2, %s15
    // Predicated region
    $region61: #{tpu_custom_call.1} parent=5 // pred_check
      %p669 = pneg %p668
    $region62: #{tpu_custom_call.1} parent=5 // pred_check_branch
      %671 = sbr.rel (%p669) target = $region64
    $region63: #{tpu_custom_call.1} parent=5 // pred_region
      %s672 = ssub.s32 %s15, 2
      // Predicated region
      $region65: #{tpu_custom_call.1} parent=63 // pred_check
        %p673 = pneg %p243
      $region66: #{tpu_custom_call.1} parent=63 // pred_check_branch
        %675 = sbr.rel (%p673) target = $region68
      $region67: #{tpu_custom_call.1} parent=63 // pred_region
        %s676 = smul.u32 4, %s21
        %p677 = scmp.lt.s32.totalorder %s676, 7
        %s678 = scalar_select %p677, %s676, 7
        %s679 = smul.addr %s678, 4
        %s680 = scalar_lea.vmem %s9, %s679
      $region68: #{tpu_custom_call.1} parent=63 // pred_fallthru
        _
    $region64: #{tpu_custom_call.1} parent=5 // pred_fallthru
      _
  $region6: #{tpu_custom_call.1} parent=0 // loop_footer
    %s19 = sadd.s32 1, %s15
  $region7: #{tpu_custom_call.1} parent=0 // loop_footer_branch
    %14 = sbr.rel target = $region3
  $region8: #{tpu_custom_call.1} parent=0 // loop_exit
    _

</llo_original>
